<compile_context>
chip_gen: v5e
topology: v5e:2x2
jax: 0.10.0
libtpu: 0.0.40
codegen_flags: <defaults>
</compile_context>

<pallas_src>
import numpy as np
import jax
import jax.numpy as jnp
from jax import lax
from jax.experimental import pallas as pl
from jax.experimental.pallas import tpu as pltpu

# ----- problem / tiling constants -------------------------------------------
B = 2          # torch "sequence" axis of each problem (attention mixes over it)
S = 3          # number of modes (pooled over)
D = 32         # mode_in_features (d_model)
FF = 2 * D     # dim_feedforward = 2 * d_model

TN = 4                  # problems per grid step
M_TOK = TN * S * B      # tokens per grid step (flattened (problem, s, b))
TNB = TN * B            # pooled rows (= logits) per grid step

_ru8 = lambda v: (v + 7) // 8 * 8

# weight-slab column offsets (128-aligned so every region starts on a lane tile)
WQKV_C0 = 0             # (D, 3D)   in-proj weight (Q columns pre-scaled)
WO_C0 = 128             # (D, D)    out-proj weight
W1_C0 = 256             # (D, FF)   FFN linear1 weight
WB_C0 = 384             # (D, 128)  head weight replicated across 128 lanes
W_COLS = 512
# weight-slab row offsets (8-aligned)
W2_R0 = D                           # (FF, D) FFN linear2 weight at cols 0:D
MASK_R0 = _ru8(D + FF)              # (M_TOK, M_TOK) additive attention mask
POOL_R0 = _ru8(MASK_R0 + M_TOK)     # (TNB, M_TOK) mean-pool matrix
W_ROWS = _ru8(POOL_R0 + TNB)
B_ROWS = 16                         # bias slab rows (one bias vector per row)


def _layernorm(x, w, b, eps=1e-5):
    mu = jnp.mean(x, axis=-1, keepdims=True)
    var = jnp.mean((x - mu) ** 2, axis=-1, keepdims=True)
    return (x - mu) * lax.rsqrt(var + eps) * w + b


# ----- kernel ----------------------------------------------------------------
def transformer_combinator_kernel(x_ref, w_ref, b_ref, out_ref):
    x = x_ref[...]                                              # (M_TOK, D) f32

    # QKV projection: one 2-D MXU dot (Q columns / bias pre-scaled by 1/sqrt(D))
    qkv = jnp.dot(x, w_ref[0:D, WQKV_C0:WQKV_C0 + 3 * D],
                  preferred_element_type=jnp.float32) + b_ref[0:1, 0:3 * D]
    q = qkv[:, 0:D]
    k = qkv[:, D:2 * D]
    v = qkv[:, 2 * D:3 * D]

    # Packed attention: one (M, M) score matrix + additive block-diagonal mask
    # restricting each token to its own (problem, s) group of B tokens.
    scores = lax.dot_general(q, k, (((1,), (1,)), ((), ())),
                             preferred_element_type=jnp.float32)   # (M, M)
    scores = scores + w_ref[MASK_R0:MASK_R0 + M_TOK, 0:M_TOK]
    m = jnp.max(scores, axis=-1, keepdims=True)
    p = jnp.exp(scores - m)
    l_inv = pl.reciprocal(jnp.sum(p, axis=-1, keepdims=True), approx=True)
    attn = p * l_inv
    ctx = jnp.dot(attn, v, preferred_element_type=jnp.float32)     # (M, D)

    attn_out = jnp.dot(ctx, w_ref[0:D, WO_C0:WO_C0 + D],
                       preferred_element_type=jnp.float32) + b_ref[1:2, 0:D]

    # residual + LayerNorm 1
    h = _layernorm(x + attn_out, b_ref[4:5, 0:D], b_ref[5:6, 0:D])

    # feed-forward: Linear(D->2D) -> ReLU -> Linear(2D->D)
    f = jnp.dot(h, w_ref[0:D, W1_C0:W1_C0 + FF],
                preferred_element_type=jnp.float32) + b_ref[2:3, 0:FF]
    f = jnp.maximum(f, 0.0)
    f = jnp.dot(f, w_ref[W2_R0:W2_R0 + FF, 0:D],
                preferred_element_type=jnp.float32) + b_ref[3:4, 0:D]

    # residual + LayerNorm 2
    h = _layernorm(h + f, b_ref[6:7, 0:D], b_ref[7:8, 0:D])

    # mean-pool over the S modes via the precomputed pooling matrix
    pooled = jnp.dot(w_ref[POOL_R0:POOL_R0 + TNB, 0:M_TOK], h,
                     preferred_element_type=jnp.float32)           # (TNB, D)

    # head Linear(D,1) (weight replicated across 128 lanes -> lane-dense store)
    logits = jnp.dot(pooled, w_ref[0:D, WB_C0:WB_C0 + 128],
                     preferred_element_type=jnp.float32) + b_ref[8:9, 0:128]
    out_ref[...] = (1.0 / (1.0 + jnp.exp(-logits))).astype(out_ref.dtype)
    # TODO(synk): cls_token / positional-encoding / weight_sharing /
    # interval_type branches are inactive in the default config and not emitted.


# ----- host-side parameter packing into two slabs ----------------------------
def pack_params(params):
    (wqkv, bqkv, wo, bo, ln1w, ln1b, w1, b1, w2, b2, ln2w, ln2b, wb, bb) = params
    scale = 1.0 / float(np.sqrt(D))
    col_scale = jnp.concatenate(
        [jnp.full((D,), scale, jnp.float32), jnp.ones((2 * D,), jnp.float32)])
    wqkv_t = wqkv.T * col_scale[None, :]        # (D, 3D), Q columns pre-scaled
    bqkv_s = bqkv * col_scale

    w_slab = jnp.zeros((W_ROWS, W_COLS), jnp.float32)
    w_slab = w_slab.at[0:D, WQKV_C0:WQKV_C0 + 3 * D].set(wqkv_t)
    w_slab = w_slab.at[0:D, WO_C0:WO_C0 + D].set(wo.T)
    w_slab = w_slab.at[0:D, W1_C0:W1_C0 + FF].set(w1.T)
    w_slab = w_slab.at[0:D, WB_C0:WB_C0 + 128].set(
        jnp.broadcast_to(wb.T, (D, 128)))
    w_slab = w_slab.at[W2_R0:W2_R0 + FF, 0:D].set(w2.T)

    # additive block-diagonal attention mask: token t belongs to group t // B
    g = np.arange(M_TOK) // B
    mask = np.where(g[:, None] == g[None, :], 0.0, -1e30).astype(np.float32)
    w_slab = w_slab.at[MASK_R0:MASK_R0 + M_TOK, 0:M_TOK].set(mask)

    # mean-pool matrix: pooled[(n,b)] = (1/S) * sum_s token[(n,s,b)]
    r = np.arange(TNB)
    t = np.arange(M_TOK)
    sel = ((t[None, :] // (S * B)) == (r[:, None] // B)) & \
          ((t[None, :] % B) == (r[:, None] % B))
    pool = np.where(sel, 1.0 / S, 0.0).astype(np.float32)
    w_slab = w_slab.at[POOL_R0:POOL_R0 + TNB, 0:M_TOK].set(pool)

    b_slab = jnp.zeros((B_ROWS, 128), jnp.float32)
    b_slab = b_slab.at[0, 0:3 * D].set(bqkv_s)
    b_slab = b_slab.at[1, 0:D].set(bo)
    b_slab = b_slab.at[2, 0:FF].set(b1)
    b_slab = b_slab.at[3, 0:D].set(b2)
    b_slab = b_slab.at[4, 0:D].set(ln1w)
    b_slab = b_slab.at[5, 0:D].set(ln1b)
    b_slab = b_slab.at[6, 0:D].set(ln2w)
    b_slab = b_slab.at[7, 0:D].set(ln2b)
    b_slab = b_slab.at[8, :].set(jnp.broadcast_to(bb, (128,)))
    return w_slab, b_slab


# ----- wrapper ----------------------------------------------------------------
def transformer_combinator(x, w_slab, b_slab):
    """x: (N, B, S, D) — N independent problems. Returns (N, B) sigmoid probs."""
    n = x.shape[0]
    assert x.shape[1:] == (B, S, D) and n % TN == 0
    # (N, B, S, D) -> (N, S, B, D) -> flat tokens (N*S*B, D), order (n, s, b)
    x_tok = jnp.transpose(x, (0, 2, 1, 3)).reshape(n * S * B, D)

    out = pl.pallas_call(
        transformer_combinator_kernel,
        out_shape=jax.ShapeDtypeStruct((n * B, 128), jnp.float32),
        grid_spec=pltpu.PrefetchScalarGridSpec(
            num_scalar_prefetch=0,
            grid=(n // TN,),
            in_specs=[
                pl.BlockSpec((M_TOK, D), lambda i: (i, 0)),       # tokens tile
                pl.BlockSpec((W_ROWS, W_COLS), lambda i: (0, 0)),  # weight slab
                pl.BlockSpec((B_ROWS, 128), lambda i: (0, 0)),     # bias slab
            ],
            out_specs=pl.BlockSpec((TNB, 128), lambda i: (i, 0)),
        ),
        compiler_params=pltpu.CompilerParams(
            dimension_semantics=("parallel",),
            vmem_limit_bytes=32 * 1024 * 1024,
        ),
    )(x_tok, w_slab, b_slab)
    return out[:, 0].reshape(n, B)


# ----- pure-JAX reference (torch semantics) -----------------------------------
def _ln_ref(x, w, b, eps=1e-5):
    mu = jnp.mean(x, axis=-1, keepdims=True)
    var = jnp.mean((x - mu) ** 2, axis=-1, keepdims=True)
    return (x - mu) * lax.rsqrt(var + eps) * w + b


def _reference(x, params):
    (wqkv, bqkv, wo, bo, ln1w, ln1b, w1, b1, w2, b2, ln2w, ln2b, wb, bb) = params
    qkv = jnp.einsum('nbsd,ed->nbse', x, wqkv) + bqkv
    q, k, v = qkv[..., :D], qkv[..., D:2 * D], qkv[..., 2 * D:]
    scores = jnp.einsum('nbsd,ncsd->nsbc', q, k) / jnp.sqrt(jnp.float32(D))
    attn = jax.nn.softmax(scores, axis=-1)
    ctx = jnp.einsum('nsbc,ncsd->nbsd', attn, v)
    attn_out = jnp.einsum('nbsd,ed->nbse', ctx, wo) + bo
    h = _ln_ref(x + attn_out, ln1w, ln1b)
    f = jnp.maximum(jnp.einsum('nbsd,ed->nbse', h, w1) + b1, 0.0)
    f = jnp.einsum('nbse,de->nbsd', f, w2) + b2
    h = _ln_ref(h + f, ln2w, ln2b)
    pooled = jnp.mean(h, axis=2)                                   # (N, B, D)
    logits = jnp.einsum('nbd,od->nbo', pooled, wb) + bb            # (N, B, 1)
    return jax.nn.sigmoid(logits[..., 0])                          # (N, B)


if __name__ == "__main__":
    key = jax.random.PRNGKey(0)
    ks = jax.random.split(key, 16)
    scl = 0.1
    N = 8   # number of independent (B, S, D) problems batched into one call

    x = jax.random.normal(ks[0], (N, B, S, D), jnp.float32)

    wqkv = scl * jax.random.normal(ks[1], (3 * D, D), jnp.float32)   # in_proj_weight
    bqkv = scl * jax.random.normal(ks[2], (3 * D,), jnp.float32)     # in_proj_bias
    wo   = scl * jax.random.normal(ks[3], (D, D), jnp.float32)       # out_proj.weight
    bo   = scl * jax.random.normal(ks[4], (D,), jnp.float32)         # out_proj.bias
    ln1w = 1.0 + scl * jax.random.normal(ks[5], (D,), jnp.float32)
    ln1b = scl * jax.random.normal(ks[6], (D,), jnp.float32)
    w1   = scl * jax.random.normal(ks[7], (FF, D), jnp.float32)      # linear1.weight
    b1   = scl * jax.random.normal(ks[8], (FF,), jnp.float32)        # linear1.bias
    w2   = scl * jax.random.normal(ks[9], (D, FF), jnp.float32)      # linear2.weight
    b2   = scl * jax.random.normal(ks[10], (D,), jnp.float32)        # linear2.bias
    ln2w = 1.0 + scl * jax.random.normal(ks[11], (D,), jnp.float32)
    ln2b = scl * jax.random.normal(ks[12], (D,), jnp.float32)
    wb   = scl * jax.random.normal(ks[13], (1, D), jnp.float32)      # backbone Linear(D,1)
    bb   = scl * jax.random.normal(ks[14], (1,), jnp.float32)

    params = (wqkv, bqkv, wo, bo, ln1w, ln1b, w1, b1, w2, b2,
              ln2w, ln2b, wb, bb)
    w_slab, b_slab = pack_params(params)

    out = transformer_combinator(x, w_slab, b_slab)
    jax.block_until_ready(out)

    ref = _reference(x, params)
    assert out.shape == (N, B)
    # tolerance loosened slightly for the EUP approximate reciprocal in softmax
    assert jnp.allclose(out, ref, atol=2e-3, rtol=2e-3), (out, ref)
    print("KERNEL_OK")
</pallas_src>

<mosaic_0001>
module attributes {stable_mosaic.version = 11 : i64} {
  func.func @transformer_combinator_kernel(%arg0: i32, %arg1: memref<24x32xf32, #tpu.memory_space<vmem>>, %arg2: memref<128x512xf32, #tpu.memory_space<vmem>>, %arg3: memref<16x128xf32, #tpu.memory_space<vmem>>, %arg4: memref<8x128xf32, #tpu.memory_space<vmem>>) attributes {dimension_semantics = [#tpu.dimension_semantics<parallel>], iteration_bounds = array<i64: 2>, scalar_prefetch = 0 : i64, scratch_operands = 0 : i64, tpu.core_type = #tpu.core_type<tc>, window_params = [{transform_indices = @transform_0, window_bounds = array<i64: 24, 32>}, {pipeline_mode = #tpu.pipeline_mode<synchronous>, transform_indices = @transform_1, window_bounds = array<i64: 128, 512>}, {pipeline_mode = #tpu.pipeline_mode<synchronous>, transform_indices = @transform_2, window_bounds = array<i64: 16, 128>}, {transform_indices = @transform_3, window_bounds = array<i64: 8, 128>}]} {
    %c0 = arith.constant 0 : index
    %c0_0 = arith.constant 0 : index
    %0 = vector.load %arg1[%c0, %c0_0] : memref<24x32xf32, #tpu.memory_space<vmem>>, vector<24x32xf32>
    %c0_1 = arith.constant 0 : index
    %c0_2 = arith.constant 0 : index
    %1 = vector.load %arg2[%c0_1, %c0_2] : memref<128x512xf32, #tpu.memory_space<vmem>>, vector<32x96xf32>
    %cst = arith.constant dense<0.000000e+00> : vector<24x96xf32>
    %2 = tpu.matmul %0, %1, %cst {dimension_numbers = #tpu.dot_dimension_numbers<[1], [0], [0], [1], [0, 0, 1, 1], [], []>} : vector<24x32xf32>, vector<32x96xf32>, vector<24x96xf32> -> vector<24x96xf32>
    %c0_3 = arith.constant 0 : index
    %c0_4 = arith.constant 0 : index
    %3 = vector.load %arg3[%c0_3, %c0_4] : memref<16x128xf32, #tpu.memory_space<vmem>>, vector<1x96xf32>
    %4 = vector.broadcast %3 : vector<1x96xf32> to vector<24x96xf32>
    %5 = arith.addf %2, %4 : vector<24x96xf32>
    %6 = vector.extract_strided_slice %5 {offsets = [0, 0], sizes = [24, 32], strides = [1, 1]} : vector<24x96xf32> to vector<24x32xf32>
    %7 = vector.extract_strided_slice %5 {offsets = [0, 32], sizes = [24, 32], strides = [1, 1]} : vector<24x96xf32> to vector<24x32xf32>
    %8 = vector.extract_strided_slice %5 {offsets = [0, 64], sizes = [24, 32], strides = [1, 1]} : vector<24x96xf32> to vector<24x32xf32>
    %cst_5 = arith.constant dense<0.000000e+00> : vector<24x24xf32>
    %9 = tpu.matmul %6, %7, %cst_5 {dimension_numbers = #tpu.dot_dimension_numbers<[1], [1], [0], [0], [0, 0, 1, 0], [], []>} : vector<24x32xf32>, vector<24x32xf32>, vector<24x24xf32> -> vector<24x24xf32>
    %c96 = arith.constant 96 : index
    %c0_6 = arith.constant 0 : index
    %10 = vector.load %arg2[%c96, %c0_6] : memref<128x512xf32, #tpu.memory_space<vmem>>, vector<24x24xf32>
    %11 = arith.addf %9, %10 : vector<24x24xf32>
    %cst_7 = arith.constant dense<0xFF800000> : vector<24xf32>
    %12 = vector.multi_reduction <maximumf>, %11, %cst_7 [1] : vector<24x24xf32> to vector<24xf32>
    %13 = vector.shape_cast %12 : vector<24xf32> to vector<24x1xf32>
    %14 = vector.broadcast %13 : vector<24x1xf32> to vector<24x24xf32>
    %15 = arith.subf %11, %14 : vector<24x24xf32>
    %16 = math.exp %15 : vector<24x24xf32>
    %cst_8 = arith.constant dense<0.000000e+00> : vector<24xf32>
    %17 = vector.multi_reduction <add>, %16, %cst_8 [1] : vector<24x24xf32> to vector<24xf32>
    %18 = vector.shape_cast %17 : vector<24xf32> to vector<24x1xf32>
    %19 = tpu.reciprocal %18 {approx = true} : vector<24x1xf32> -> vector<24x1xf32>
    %20 = vector.broadcast %19 : vector<24x1xf32> to vector<24x24xf32>
    %21 = arith.mulf %16, %20 : vector<24x24xf32>
    %cst_9 = arith.constant dense<0.000000e+00> : vector<24x32xf32>
    %22 = tpu.matmul %21, %8, %cst_9 {dimension_numbers = #tpu.dot_dimension_numbers<[1], [0], [0], [1], [0, 0, 1, 1], [], []>} : vector<24x24xf32>, vector<24x32xf32>, vector<24x32xf32> -> vector<24x32xf32>
    %c0_10 = arith.constant 0 : index
    %c128 = arith.constant 128 : index
    %23 = vector.load %arg2[%c0_10, %c128] : memref<128x512xf32, #tpu.memory_space<vmem>>, vector<32x32xf32>
    %cst_11 = arith.constant dense<0.000000e+00> : vector<24x32xf32>
    %24 = tpu.matmul %22, %23, %cst_11 {dimension_numbers = #tpu.dot_dimension_numbers<[1], [0], [0], [1], [0, 0, 1, 1], [], []>} : vector<24x32xf32>, vector<32x32xf32>, vector<24x32xf32> -> vector<24x32xf32>
    %c1 = arith.constant 1 : index
    %c0_12 = arith.constant 0 : index
    %25 = vector.load %arg3[%c1, %c0_12] : memref<16x128xf32, #tpu.memory_space<vmem>>, vector<1x32xf32>
    %26 = vector.broadcast %25 : vector<1x32xf32> to vector<24x32xf32>
    %27 = arith.addf %24, %26 : vector<24x32xf32>
    %28 = arith.addf %0, %27 : vector<24x32xf32>
    %c4 = arith.constant 4 : index
    %c0_13 = arith.constant 0 : index
    %29 = vector.load %arg3[%c4, %c0_13] : memref<16x128xf32, #tpu.memory_space<vmem>>, vector<1x32xf32>
    %c5 = arith.constant 5 : index
    %c0_14 = arith.constant 0 : index
    %30 = vector.load %arg3[%c5, %c0_14] : memref<16x128xf32, #tpu.memory_space<vmem>>, vector<1x32xf32>
    %cst_15 = arith.constant dense<0.000000e+00> : vector<24xf32>
    %31 = vector.multi_reduction <add>, %28, %cst_15 [1] : vector<24x32xf32> to vector<24xf32>
    %32 = vector.shape_cast %31 : vector<24xf32> to vector<24x1xf32>
    %cst_16 = arith.constant 3.200000e+01 : f32
    %33 = vector.broadcast %cst_16 : f32 to vector<24x1xf32>
    %34 = arith.divf %32, %33 : vector<24x1xf32>
    %35 = vector.broadcast %34 : vector<24x1xf32> to vector<24x32xf32>
    %36 = arith.subf %28, %35 : vector<24x32xf32>
    %37 = arith.mulf %36, %36 : vector<24x32xf32>
    %cst_17 = arith.constant dense<0.000000e+00> : vector<24xf32>
    %38 = vector.multi_reduction <add>, %37, %cst_17 [1] : vector<24x32xf32> to vector<24xf32>
    %39 = vector.shape_cast %38 : vector<24xf32> to vector<24x1xf32>
    %cst_18 = arith.constant 3.200000e+01 : f32
    %40 = vector.broadcast %cst_18 : f32 to vector<24x1xf32>
    %41 = arith.divf %39, %40 : vector<24x1xf32>
    %42 = vector.broadcast %34 : vector<24x1xf32> to vector<24x32xf32>
    %43 = arith.subf %28, %42 : vector<24x32xf32>
    %cst_19 = arith.constant 9.99999974E-6 : f32
    %44 = vector.broadcast %cst_19 : f32 to vector<24x1xf32>
    %45 = arith.addf %41, %44 : vector<24x1xf32>
    %46 = math.rsqrt %45 : vector<24x1xf32>
    %47 = vector.broadcast %46 : vector<24x1xf32> to vector<24x32xf32>
    %48 = arith.mulf %43, %47 : vector<24x32xf32>
    %49 = vector.broadcast %29 : vector<1x32xf32> to vector<24x32xf32>
    %50 = arith.mulf %48, %49 : vector<24x32xf32>
    %51 = vector.broadcast %30 : vector<1x32xf32> to vector<24x32xf32>
    %52 = arith.addf %50, %51 : vector<24x32xf32>
    %c0_20 = arith.constant 0 : index
    %c256 = arith.constant 256 : index
    %53 = vector.load %arg2[%c0_20, %c256] : memref<128x512xf32, #tpu.memory_space<vmem>>, vector<32x64xf32>
    %cst_21 = arith.constant dense<0.000000e+00> : vector<24x64xf32>
    %54 = tpu.matmul %52, %53, %cst_21 {dimension_numbers = #tpu.dot_dimension_numbers<[1], [0], [0], [1], [0, 0, 1, 1], [], []>} : vector<24x32xf32>, vector<32x64xf32>, vector<24x64xf32> -> vector<24x64xf32>
    %c2 = arith.constant 2 : index
    %c0_22 = arith.constant 0 : index
    %55 = vector.load %arg3[%c2, %c0_22] : memref<16x128xf32, #tpu.memory_space<vmem>>, vector<1x64xf32>
    %56 = vector.broadcast %55 : vector<1x64xf32> to vector<24x64xf32>
    %57 = arith.addf %54, %56 : vector<24x64xf32>
    %cst_23 = arith.constant 0.000000e+00 : f32
    %58 = vector.broadcast %cst_23 : f32 to vector<24x64xf32>
    %59 = arith.maximumf %57, %58 : vector<24x64xf32>
    %c32 = arith.constant 32 : index
    %c0_24 = arith.constant 0 : index
    %60 = vector.load %arg2[%c32, %c0_24] : memref<128x512xf32, #tpu.memory_space<vmem>>, vector<64x32xf32>
    %cst_25 = arith.constant dense<0.000000e+00> : vector<24x32xf32>
    %61 = tpu.matmul %59, %60, %cst_25 {dimension_numbers = #tpu.dot_dimension_numbers<[1], [0], [0], [1], [0, 0, 1, 1], [], []>} : vector<24x64xf32>, vector<64x32xf32>, vector<24x32xf32> -> vector<24x32xf32>
    %c3 = arith.constant 3 : index
    %c0_26 = arith.constant 0 : index
    %62 = vector.load %arg3[%c3, %c0_26] : memref<16x128xf32, #tpu.memory_space<vmem>>, vector<1x32xf32>
    %63 = vector.broadcast %62 : vector<1x32xf32> to vector<24x32xf32>
    %64 = arith.addf %61, %63 : vector<24x32xf32>
    %65 = arith.addf %52, %64 : vector<24x32xf32>
    %c6 = arith.constant 6 : index
    %c0_27 = arith.constant 0 : index
    %66 = vector.load %arg3[%c6, %c0_27] : memref<16x128xf32, #tpu.memory_space<vmem>>, vector<1x32xf32>
    %c7 = arith.constant 7 : index
    %c0_28 = arith.constant 0 : index
    %67 = vector.load %arg3[%c7, %c0_28] : memref<16x128xf32, #tpu.memory_space<vmem>>, vector<1x32xf32>
    %cst_29 = arith.constant dense<0.000000e+00> : vector<24xf32>
    %68 = vector.multi_reduction <add>, %65, %cst_29 [1] : vector<24x32xf32> to vector<24xf32>
    %69 = vector.shape_cast %68 : vector<24xf32> to vector<24x1xf32>
    %cst_30 = arith.constant 3.200000e+01 : f32
    %70 = vector.broadcast %cst_30 : f32 to vector<24x1xf32>
    %71 = arith.divf %69, %70 : vector<24x1xf32>
    %72 = vector.broadcast %71 : vector<24x1xf32> to vector<24x32xf32>
    %73 = arith.subf %65, %72 : vector<24x32xf32>
    %74 = arith.mulf %73, %73 : vector<24x32xf32>
    %cst_31 = arith.constant dense<0.000000e+00> : vector<24xf32>
    %75 = vector.multi_reduction <add>, %74, %cst_31 [1] : vector<24x32xf32> to vector<24xf32>
    %76 = vector.shape_cast %75 : vector<24xf32> to vector<24x1xf32>
    %cst_32 = arith.constant 3.200000e+01 : f32
    %77 = vector.broadcast %cst_32 : f32 to vector<24x1xf32>
    %78 = arith.divf %76, %77 : vector<24x1xf32>
    %79 = vector.broadcast %71 : vector<24x1xf32> to vector<24x32xf32>
    %80 = arith.subf %65, %79 : vector<24x32xf32>
    %cst_33 = arith.constant 9.99999974E-6 : f32
    %81 = vector.broadcast %cst_33 : f32 to vector<24x1xf32>
    %82 = arith.addf %78, %81 : vector<24x1xf32>
    %83 = math.rsqrt %82 : vector<24x1xf32>
    %84 = vector.broadcast %83 : vector<24x1xf32> to vector<24x32xf32>
    %85 = arith.mulf %80, %84 : vector<24x32xf32>
    %86 = vector.broadcast %66 : vector<1x32xf32> to vector<24x32xf32>
    %87 = arith.mulf %85, %86 : vector<24x32xf32>
    %88 = vector.broadcast %67 : vector<1x32xf32> to vector<24x32xf32>
    %89 = arith.addf %87, %88 : vector<24x32xf32>
    %c120 = arith.constant 120 : index
    %c0_34 = arith.constant 0 : index
    %90 = vector.load %arg2[%c120, %c0_34] : memref<128x512xf32, #tpu.memory_space<vmem>>, vector<8x24xf32>
    %cst_35 = arith.constant dense<0.000000e+00> : vector<8x32xf32>
    %91 = tpu.matmul %90, %89, %cst_35 {dimension_numbers = #tpu.dot_dimension_numbers<[1], [0], [0], [1], [0, 0, 1, 1], [], []>} : vector<8x24xf32>, vector<24x32xf32>, vector<8x32xf32> -> vector<8x32xf32>
    %c0_36 = arith.constant 0 : index
    %c384 = arith.constant 384 : index
    %92 = vector.load %arg2[%c0_36, %c384] : memref<128x512xf32, #tpu.memory_space<vmem>>, vector<32x128xf32>
    %cst_37 = arith.constant dense<0.000000e+00> : vector<8x128xf32>
    %93 = tpu.matmul %91, %92, %cst_37 {dimension_numbers = #tpu.dot_dimension_numbers<[1], [0], [0], [1], [0, 0, 1, 1], [], []>} : vector<8x32xf32>, vector<32x128xf32>, vector<8x128xf32> -> vector<8x128xf32>
    %c8 = arith.constant 8 : index
    %c0_38 = arith.constant 0 : index
    %94 = vector.load %arg3[%c8, %c0_38] : memref<16x128xf32, #tpu.memory_space<vmem>>, vector<1x128xf32>
    %95 = vector.broadcast %94 : vector<1x128xf32> to vector<8x128xf32>
    %96 = arith.addf %93, %95 : vector<8x128xf32>
    %cst_39 = arith.constant 0.000000e+00 : f32
    %97 = vector.broadcast %cst_39 : f32 to vector<8x128xf32>
    %98 = arith.subf %97, %96 : vector<8x128xf32>
    %99 = math.exp %98 : vector<8x128xf32>
    %cst_40 = arith.constant 1.000000e+00 : f32
    %100 = vector.broadcast %cst_40 : f32 to vector<8x128xf32>
    %101 = arith.addf %100, %99 : vector<8x128xf32>
    %cst_41 = arith.constant 1.000000e+00 : f32
    %102 = vector.broadcast %cst_41 : f32 to vector<8x128xf32>
    %103 = arith.divf %102, %101 : vector<8x128xf32>
    %c0_42 = arith.constant 0 : index
    %c0_43 = arith.constant 0 : index
    %104 = vector.load %arg4[%c0_42, %c0_43] : memref<8x128xf32, #tpu.memory_space<vmem>>, vector<8x128xf32>
    tpu.vector_store %arg4[%c0_42, %c0_43], %103 {strides = array<i32>} : memref<8x128xf32, #tpu.memory_space<vmem>>, vector<8x128xf32>,
    return
  }
  func.func @transform_0(%arg0: i32) -> (i32, i32) {
    %c0_i32 = arith.constant 0 : i32
    %c0_i32_0 = arith.constant 0 : i32
    return %arg0, %c0_i32 : i32, i32
  }
  func.func @transform_1(%arg0: i32) -> (i32, i32) {
    %c0_i32 = arith.constant 0 : i32
    %c0_i32_0 = arith.constant 0 : i32
    %c0_i32_1 = arith.constant 0 : i32
    return %c0_i32, %c0_i32_0 : i32, i32
  }
  func.func @transform_2(%arg0: i32) -> (i32, i32) {
    %c0_i32 = arith.constant 0 : i32
    %c0_i32_0 = arith.constant 0 : i32
    %c0_i32_1 = arith.constant 0 : i32
    return %c0_i32, %c0_i32_0 : i32, i32
  }
  func.func @transform_3(%arg0: i32) -> (i32, i32) {
    %c0_i32 = arith.constant 0 : i32
    %c0_i32_0 = arith.constant 0 : i32
    return %arg0, %c0_i32 : i32, i32
  }
}

</mosaic_0001>

<llo_original>
// kernel: tpu_custom_call.1
$region0: #{tpu_custom_call.1}
  #allocation0 [shape = 'u32[]', space=smem, size = 0x4, offset = 0x4, fixed_abs, tag = 'smem constant byte address 0x4 - core index']
  #allocation1 [shape = 'u32[72,128]{1,0:T(1,128)}', space=vmem, size = 0x9000, scoped, tag = 'internal scratch']
  %s0 = inlined_call_operand.vmem [shape: f32[48,32], index: 0, kind: input, shape index: {}]
  %s1 = inlined_call_operand.hbm [shape: f32[128,512], index: 1, kind: input, shape index: {}]
  %s2 = inlined_call_operand.vmem [shape: f32[16,128], index: 2, kind: input, shape index: {}]
  %s3 = inlined_call_operand.hbm [shape: f32[16,128], index: 3, kind: output, shape index: {}]
  %s4 = sld [smem:[#allocation0]]
  $region49: #{tpu_custom_call.1} parent=0
    _
  %s6 = ssub.s32 1, %s4
  %s7 = scalar_select 0, %s6, %s4
  $region1: #{tpu_custom_call.1} parent=0
    #allocation2 [shape = 'u8[262144]{0}', space=vmem, size = 0x40000, scoped, tag = 'input window, operand 1, single buffered']
    #allocation3 [shape = 's32[2]{0}', space=sflag, size = 0x8, scoped, tag = 'scoped memory for tpu_custom_call.1']
    #allocation4 [shape = 's32[2]{0}', space=sflag, size = 0x8, scoped, tag = 'scoped memory for tpu_custom_call.1']
    #allocation5 [shape = 'u8[8192]{0}', space=vmem, size = 0x2000, scoped, tag = 'output window, operand 0']
    %8 = vsyncpa [#allocation3], 0
    %9 = vsyncpa [#allocation4], 0
    %s10 = scalar_lea.sflag [#allocation4], 1
    %11 = vsyncpa %s10, 0
    loop: start=0, step=1, limit=4
    $region2: #{tpu_custom_call.1} parent=1 // loop_pre_header
      _
    $region3: #{tpu_custom_call.1} parent=1 // loop_header
      %s13 = sphi 0, %s17
      %p14 = scmp.ge.s32.totalorder %s13, 4
      %s23 = sphi 0, %s25
      %s26 = sphi 0, %s23
      %s27 = sphi 0, %s26
      %s43 = sphi 0, %s27
      %s47 = sphi 0, %s47
      %s49 = sphi 0, %s47
      %s50 = sphi 0, %s49
      %s64 = sphi 0, %s50
      %s68 = sphi 0, %s68
      %s70 = sphi 0, %s68
      %s71 = sphi 0, %s70
      %s85 = sphi 0, %s71
      %s91 = sphi 0, %s93
      %s94 = sphi 0, %s91
      %s95 = sphi 0, %s94
      %s111 = sphi 0, %s95
    $region4: #{tpu_custom_call.1} parent=1 // loop_header_branch
      %16 = sbr.rel (%p14) target = $region8
    $region5: #{tpu_custom_call.1} parent=1 // loop_body
      %s18 = ssub.s32 %s13, 1
      %s19 = ssub.s32 %s13, 2
      %s20 = sadd.s32 %s13, 1
      %s21 = ssub.s32 %s13, %s20
      %p22 = scmp.eq.s32.totalorder %s21, 0
      %s24 = sadd.s32 %s23, 1
      %s25 = scalar_select %p22, %s23, %s24
      %p28 = pneg %p22
      %p29 = scmp.eq.s32.totalorder %s13, 1
      %p30 = por %p28, %p29
      %p31 = scmp.ne.s32.totalorder %s23, %s26
      %p32 = scmp.eq.s32.totalorder %s13, 0
      %p33 = por %p31, %p32
      %p34 = scmp.ne.s32.totalorder %s23, %s26
      %p35 = scmp.eq.s32.totalorder %s18, 1
      %p36 = por %p34, %p35
      %p37 = scmp.ne.s32.totalorder %s26, %s27
      %p38 = scmp.eq.s32.totalorder %s18, 0
      %p39 = por %p37, %p38
      %p40 = scmp.ne.s32.totalorder %s26, %s27
      %p41 = scmp.eq.s32.totalorder %s19, 1
      %p42 = por %p40, %p41
      %p44 = scmp.ne.s32.totalorder %s27, %s43
      %p45 = scmp.eq.s32.totalorder %s19, 0
      %p46 = por %p44, %p45
      %s48 = sadd.s32 %s47, 1
      %p51 = scmp.eq.s32.totalorder %s13, 1
      %p52 = scmp.ne.s32.totalorder %s47, %s49
      %p53 = scmp.eq.s32.totalorder %s13, 0
      %p54 = por %p52, %p53
      %p55 = scmp.ne.s32.totalorder %s47, %s49
      %p56 = scmp.eq.s32.totalorder %s18, 1
      %p57 = por %p55, %p56
      %p58 = scmp.ne.s32.totalorder %s49, %s50
      %p59 = scmp.eq.s32.totalorder %s18, 0
      %p60 = por %p58, %p59
      %p61 = scmp.ne.s32.totalorder %s49, %s50
      %p62 = scmp.eq.s32.totalorder %s19, 1
      %p63 = por %p61, %p62
      %p65 = scmp.ne.s32.totalorder %s50, %s64
      %p66 = scmp.eq.s32.totalorder %s19, 0
      %p67 = por %p65, %p66
      %s69 = sadd.s32 %s68, 1
      %p72 = scmp.eq.s32.totalorder %s13, 1
      %p73 = scmp.ne.s32.totalorder %s68, %s70
      %p74 = scmp.eq.s32.totalorder %s13, 0
      %p75 = por %p73, %p74
      %p76 = scmp.ne.s32.totalorder %s68, %s70
      %p77 = scmp.eq.s32.totalorder %s18, 1
      %p78 = por %p76, %p77
      %p79 = scmp.ne.s32.totalorder %s70, %s71
      %p80 = scmp.eq.s32.totalorder %s18, 0
      %p81 = por %p79, %p80
      %p82 = scmp.ne.s32.totalorder %s70, %s71
      %p83 = scmp.eq.s32.totalorder %s19, 1
      %p84 = por %p82, %p83
      %p86 = scmp.ne.s32.totalorder %s71, %s85
      %p87 = scmp.eq.s32.totalorder %s19, 0
      %p88 = por %p86, %p87
      %s89 = ssub.s32 %s13, %s20
      %p90 = scmp.eq.s32.totalorder %s89, 0
      %s92 = sadd.s32 %s91, 1
      %s93 = scalar_select %p90, %s91, %s92
      %p96 = pneg %p90
      %p97 = scmp.eq.s32.totalorder %s13, 1
      %p98 = por %p96, %p97
      %p99 = scmp.ne.s32.totalorder %s91, %s94
      %p100 = scmp.eq.s32.totalorder %s13, 0
      %p101 = por %p99, %p100
      %p102 = scmp.ne.s32.totalorder %s91, %s94
      %p103 = scmp.eq.s32.totalorder %s18, 1
      %p104 = por %p102, %p103
      %p105 = scmp.ne.s32.totalorder %s94, %s95
      %p106 = scmp.eq.s32.totalorder %s18, 0
      %p107 = por %p105, %p106
      %p108 = scmp.ne.s32.totalorder %s94, %s95
      %p109 = scmp.eq.s32.totalorder %s19, 1
      %p110 = por %p108, %p109
      %p112 = scmp.ne.s32.totalorder %s95, %s111
      %p113 = scmp.eq.s32.totalorder %s19, 0
      %p114 = por %p112, %p113
      %p115 = scmp.le.s32.totalorder 1, %s13
      %p116 = scmp.lt.s32.totalorder %s13, 3
      %p117 = pnand %p115, %p116
      %p118 = pneg %p117
      // Predicated region
      $region9: #{tpu_custom_call.1} parent=5 // pred_check
        _
      $region10: #{tpu_custom_call.1} parent=5 // pred_check_branch
        %120 = sbr.rel (%p117) target = $region12
      $region11: #{tpu_custom_call.1} parent=5 // pred_region
        %s121 = ssub.s32 %s13, 1
        // Predicated region
        $region13: #{tpu_custom_call.1} parent=11 // pred_check
          %p122 = pneg %p60
        $region14: #{tpu_custom_call.1} parent=11 // pred_check_branch
          %124 = sbr.rel (%p122) target = $region16
        $region15: #{tpu_custom_call.1} parent=11 // pred_region
          %126 = vsyncadd [#allocation3], 0
          %s127 = sshll.u32 %s1, 4
          %s128 = int_to_ptr.hbm [resolvable:$true] %s127
          %s129 = sshll.u32 [#allocation2], 4
          %s130 = int_to_ptr.vmem [resolvable:$true] %s129
          %135 = dma.hbm_to_vmem [thread:$0]  %s128, 8192, %s130, [#allocation3], 512, 512, 32
        $region16: #{tpu_custom_call.1} parent=11 // pred_fallthru
          _
        // Predicated region
        $region17: #{tpu_custom_call.1} parent=11 // pred_check
          %p136 = pneg %p81
        $region18: #{tpu_custom_call.1} parent=11 // pred_check_branch
          %138 = sbr.rel (%p136) target = $region20
        $region19: #{tpu_custom_call.1} parent=11 // pred_region
          _
        $region20: #{tpu_custom_call.1} parent=11 // pred_fallthru
          _
      $region12: #{tpu_custom_call.1} parent=5 // pred_fallthru
        _
      %p139 = scmp.lt.s32.totalorder %s13, 2
      // Predicated region
      $region21: #{tpu_custom_call.1} parent=5 // pred_check
        %p140 = pneg %p139
      $region22: #{tpu_custom_call.1} parent=5 // pred_check_branch
        %142 = sbr.rel (%p140) target = $region24
      $region23: #{tpu_custom_call.1} parent=5 // pred_region
        // Predicated region
        $region25: #{tpu_custom_call.1} parent=23 // pred_check
          %p143 = pneg %p33
        $region26: #{tpu_custom_call.1} parent=23 // pred_check_branch
          %145 = sbr.rel (%p143) target = $region28
        $region27: #{tpu_custom_call.1} parent=23 // pred_region
          %s146 = smul.u32 3, %s13
          %p147 = scmp.lt.s32.totalorder %s146, 5
          %s148 = scalar_select %p147, %s146, 5
          %s149 = smul.addr %s148, 8
          %s150 = scalar_lea.vmem %s0, %s149
          %s151 = smul.u32 3, %s13
        $region28: #{tpu_custom_call.1} parent=23 // pred_fallthru
          _
      $region24: #{tpu_custom_call.1} parent=5 // pred_fallthru
        _
      %p152 = scmp.le.s32.totalorder 1, %s13
      %p153 = scmp.lt.s32.totalorder %s13, 3
      %p154 = pnand %p152, %p153
      %p155 = pneg %p154
      // Predicated region
      $region29: #{tpu_custom_call.1} parent=5 // pred_check
        _
      $region30: #{tpu_custom_call.1} parent=5 // pred_check_branch
        %157 = sbr.rel (%p154) target = $region32
      $region31: #{tpu_custom_call.1} parent=5 // pred_region
        %s158 = ssub.s32 %s13, 1
        // Predicated region
        $region33: #{tpu_custom_call.1} parent=31 // pred_check
          %p159 = pneg %p60
        $region34: #{tpu_custom_call.1} parent=31 // pred_check_branch
          %161 = sbr.rel (%p159) target = $region36
        $region35: #{tpu_custom_call.1} parent=31 // pred_region
          %163 = dma.done [#allocation3], 8192
        $region36: #{tpu_custom_call.1} parent=31 // pred_fallthru
          _
        %s164 = smul.u32 3, %s18
        %p165 = scmp.lt.s32.totalorder %s164, 5
        %s166 = scalar_select %p165, %s164, 5
        %s167 = smul.addr %s166, 8
        %s168 = scalar_lea.vmem %s0, %s167
        %p169 = pneg %p39
        %p170 = pneg %p36
        %p171 = pneg %p60
        %p172 = pneg %p57
        %p173 = pneg %p81
        %p174 = pneg %p78
        %p175 = pneg %p107
        %p176 = pneg %p104
        %s177 = sand.u32 %s94, 1
        %s178 = scalar_lea.sflag [#allocation4], %s177
        %s179 = sand.u32 %s94, 1
        %s180 = smul.addr %s179, 8
        %s181 = scalar_lea.vmem [#allocation5], %s180
        %s182 = smul.u32 3, %s18
        %p183 = scmp.lt.s32.totalorder %s182, 5
        %s184 = scalar_select %p183, %s182, 5
        %s185 = smul.addr %s184, 8
        %s186 = scalar_lea.vmem %s0, %s185
        %s187 = smul.u32 3, %s18
        %v188 = vld [vmem:[%s186] sm:$0xff]
        %v189 = vld [vmem:[%s186 + $0x8] sm:$0xff]
        %v190 = vld [vmem:[%s186 + $0x10] sm:$0xff]
        %v191 = vld [vmem:[#allocation2] sm:$0xff]
        %v192 = vld [vmem:[#allocation2 + $0x20] sm:$0xff]
        %v193 = vld [vmem:[#allocation2 + $0x40] sm:$0xff]
        %v194 = vld [vmem:[#allocation2 + $0x60] sm:$0xff]
        %v195 = vld [vmem:[%s2] sm:$0x1]
        %v196 = vperm.slane %v195, 0
        %vm197 = vcmask 261120
        %v199 = vsel %vm197, %v188, 0
        %v202 = vsel %vm197, %v189, 0
        %v205 = vsel %vm197, %v190, 0
        %207 = vmatpush.msra.mxu0 0.0
        %208 = vmatpush.msra.mxu0 0.0
        %209 = vmatpush.msra.mxu0 0.0
        %210 = vmatpush.msra.mxu0 0.0
        %211 = vmatpush.msra.mxu0 0.0
        %212 = vmatpush.msra.mxu0 0.0
        %213 = vmatpush.msra.mxu0 0.0
        %214 = vmatpush.msra.mxu0 0.0
        %215 = vmatpush.msra.mxu0 0.0
        %216 = vmatpush.msra.mxu0 0.0
        %217 = vmatpush.msra.mxu0 0.0
        %218 = vmatpush.msra.mxu0 0.0
        %219 = vmatpush.msra.mxu0 %v194
        %220 = vmatpush.msra.mxu0 %v193
        %221 = vmatpush.msra.mxu0 %v192
        %222 = vmatpush.msra.mxu0 %v191
        %223 = vmatmul.f32.gmra.mxu0 %v199
        %v224 = vpop.f32.mrf.mxu0
        %v225 = vadd.f32 %v196, %v224
        %226 = vmatmul.f32.gmra.mxu0 %v202
        %v227 = vpop.f32.mrf.mxu0
        %v228 = vadd.f32 %v196, %v227
        %229 = vmatmul.f32.gmra.mxu0 %v205
        %v230 = vpop.f32.mrf.mxu0
        %v231 = vadd.f32 %v196, %v230
        %232 = vdwg.mxu0
        %v233 = vld [vmem:[#allocation2 + $0x180] sm:$0xff]
        %v234 = vld [vmem:[#allocation2 + $0x1a0] sm:$0xff]
        %v235 = vld [vmem:[#allocation2 + $0x1c0] sm:$0xff]
        %239 = vrot.lane.b32.xlu0 %v225, 96
        %v240 = vpop.permute.xlu0 %239
        %241 = vrot.lane.b32.xlu0 %v228, 96
        %v242 = vpop.permute.xlu0 %241
        %243 = vrot.lane.b32.xlu0 %v231, 96
        %v244 = vpop.permute.xlu0 %243
        %v245 = vsel %vm197, %v225, 0
        %v247 = vsel %vm197, %v228, 0
        %v249 = vsel %vm197, %v231, 0
        %v251 = vsel %vm197, %v240, 0
        %v253 = vsel %vm197, %v242, 0
        %v255 = vsel %vm197, %v244, 0
        %257 = vmatpush.xpose.msra.mxu0 0.0
        %258 = vmatpush.xpose.msra.mxu0 0.0
        %259 = vmatpush.xpose.msra.mxu0 0.0
        %260 = vmatpush.xpose.msra.mxu0 0.0
        %261 = vmatpush.xpose.msra.mxu0 0.0
        %262 = vmatpush.xpose.msra.mxu0 0.0
        %263 = vmatpush.xpose.msra.mxu0 0.0
        %264 = vmatpush.xpose.msra.mxu0 0.0
        %265 = vmatpush.xpose.msra.mxu0 0.0
        %266 = vmatpush.xpose.msra.mxu0 0.0
        %267 = vmatpush.xpose.msra.mxu0 0.0
        %268 = vmatpush.xpose.msra.mxu0 0.0
        %269 = vmatpush.xpose.msra.mxu0 0.0
        %270 = vmatpush.xpose.msra.mxu0 %v255
        %271 = vmatpush.xpose.msra.mxu0 %v253
        %272 = vmatpush.xpose.msra.mxu0 %v251
        %273 = vmatmul.f32.gmra.mxu0 %v245
        %v274 = vpop.f32.mrf.mxu0
        %v275 = vadd.f32 %v233, %v274
        %276 = vmatmul.f32.gmra.mxu0 %v247
        %v277 = vpop.f32.mrf.mxu0
        %v278 = vadd.f32 %v234, %v277
        %279 = vmatmul.f32.gmra.mxu0 %v249
        %v280 = vpop.f32.mrf.mxu0
        %v281 = vadd.f32 %v235, %v280
        %282 = vdwg.mxu0
        %vm283 = vcmask 195584
        %v284 = vsel %vm283, %v275, -inf
        %285 = vmax.xlane.f32.xlu0 %v284
        %v286 = vpop.xlane.xlu0 %285
        %v287 = vsel %vm283, %v278, -inf
        %288 = vmax.xlane.f32.xlu0 %v287
        %v289 = vpop.xlane.xlu0 %288
        %v290 = vsel %vm283, %v281, -inf
        %291 = vmax.xlane.f32.xlu0 %v290
        %v292 = vpop.xlane.xlu0 %291
        %v293 = vsub.f32 %v275, %v286
        %v294 = vsub.f32 %v278, %v289
        %v295 = vsub.f32 %v281, %v292
        %v296 = vmul.f32 %v293, 1.442695
        %v297 = vpow.pop %v296
        %v298 = vmul.f32 %v294, 1.442695
        %v299 = vpow.pop %v298
        %v300 = vmul.f32 %v295, 1.442695
        %v301 = vpow.pop %v300
        %v302 = vsel %vm283, %v297, 0.0
        %303 = vadd.xlane.f32.xlu0 %v302
        %v304 = vpop.xlane.xlu0 %303
        %v305 = vsel %vm283, %v299, 0.0
        %306 = vadd.xlane.f32.xlu0 %v305
        %v307 = vpop.xlane.xlu0 %306
        %v308 = vsel %vm283, %v301, 0.0
        %309 = vadd.xlane.f32.xlu0 %v308
        %v310 = vpop.xlane.xlu0 %309
        %v311 = vrcp.pop %v304
        %v312 = vrcp.pop %v307
        %v313 = vrcp.pop %v310
        %v314 = vmul.f32 %v297, %v311
        %v315 = vmul.f32 %v299, %v312
        %v316 = vmul.f32 %v301, %v313
        %317 = vrot.lane.b32.xlu0 %v225, 64
        %v318 = vpop.permute.xlu0 %317
        %319 = vrot.lane.b32.xlu0 %v228, 64
        %v320 = vpop.permute.xlu0 %319
        %321 = vrot.lane.b32.xlu0 %v231, 64
        %v322 = vpop.permute.xlu0 %321
        %v327 = vsel %vm283, %v314, 0
        %v330 = vsel %vm283, %v315, 0
        %v333 = vsel %vm283, %v316, 0
        %335 = vmatpush.msra.mxu0 0.0
        %336 = vmatpush.msra.mxu0 0.0
        %337 = vmatpush.msra.mxu0 0.0
        %338 = vmatpush.msra.mxu0 0.0
        %339 = vmatpush.msra.mxu0 0.0
        %340 = vmatpush.msra.mxu0 0.0
        %341 = vmatpush.msra.mxu0 0.0
        %342 = vmatpush.msra.mxu0 0.0
        %343 = vmatpush.msra.mxu0 0.0
        %344 = vmatpush.msra.mxu0 0.0
        %345 = vmatpush.msra.mxu0 0.0
        %346 = vmatpush.msra.mxu0 0.0
        %347 = vmatpush.msra.mxu0 0.0
        %348 = vmatpush.msra.mxu0 %v322
        %349 = vmatpush.msra.mxu0 %v320
        %350 = vmatpush.msra.mxu0 %v318
        %351 = vmatmul.f32.gmra.mxu0 %v327
        %v352 = vpop.f32.mrf.mxu0
        %v353 = vadd.f32 0.0, %v352
        %354 = vmatmul.f32.gmra.mxu0 %v330
        %v355 = vpop.f32.mrf.mxu0
        %v356 = vadd.f32 0.0, %v355
        %357 = vmatmul.f32.gmra.mxu0 %v333
        %v358 = vpop.f32.mrf.mxu0
        %v359 = vadd.f32 0.0, %v358
        %360 = vdwg.mxu0
        %v361 = vld [vmem:[#allocation2 + $0x8] sm:$0xff]
        %v362 = vld [vmem:[#allocation2 + $0x28] sm:$0xff]
        %v363 = vld [vmem:[#allocation2 + $0x48] sm:$0xff]
        %v364 = vld [vmem:[#allocation2 + $0x68] sm:$0xff]
        %v365 = vld [vmem:[%s2 + $0x1] sm:$0x1]
        %v366 = vperm.slane %v365, 0
        %v368 = vsel %vm197, %v353, 0
        %v371 = vsel %vm197, %v356, 0
        %v374 = vsel %vm197, %v359, 0
        %376 = vmatpush.msra.mxu0 0.0
        %377 = vmatpush.msra.mxu0 0.0
        %378 = vmatpush.msra.mxu0 0.0
        %379 = vmatpush.msra.mxu0 0.0
        %380 = vmatpush.msra.mxu0 0.0
        %381 = vmatpush.msra.mxu0 0.0
        %382 = vmatpush.msra.mxu0 0.0
        %383 = vmatpush.msra.mxu0 0.0
        %384 = vmatpush.msra.mxu0 0.0
        %385 = vmatpush.msra.mxu0 0.0
        %386 = vmatpush.msra.mxu0 0.0
        %387 = vmatpush.msra.mxu0 0.0
        %388 = vmatpush.msra.mxu0 %v364
        %389 = vmatpush.msra.mxu0 %v363
        %390 = vmatpush.msra.mxu0 %v362
        %391 = vmatpush.msra.mxu0 %v361
        %392 = vmatmul.f32.gmra.mxu0 %v368
        %v393 = vpop.f32.mrf.mxu0
        %v394 = vadd.f32 %v366, %v393
        %395 = vmatmul.f32.gmra.mxu0 %v371
        %v396 = vpop.f32.mrf.mxu0
        %v397 = vadd.f32 %v366, %v396
        %398 = vmatmul.f32.gmra.mxu0 %v374
        %v399 = vpop.f32.mrf.mxu0
        %v400 = vadd.f32 %v366, %v399
        %401 = vdwg.mxu0
        %v402 = vadd.f32 %v188, %v394
        %v403 = vadd.f32 %v189, %v397
        %v404 = vadd.f32 %v190, %v400
        %v405 = vld [vmem:[%s2 + $0x4] sm:$0x1]
        %v406 = vld [vmem:[%s2 + $0x5] sm:$0x1]
        %v407 = vsel %vm197, %v402, 0.0
        %408 = vadd.xlane.f32.xlu0 %v407
        %v409 = vpop.xlane.xlu0 %408
        %v410 = vsel %vm197, %v403, 0.0
        %411 = vadd.xlane.f32.xlu0 %v410
        %v412 = vpop.xlane.xlu0 %411
        %v413 = vsel %vm197, %v404, 0.0
        %414 = vadd.xlane.f32.xlu0 %v413
        %v415 = vpop.xlane.xlu0 %414
        %v416 = vrcp.pop 32.0
        %v417 = vmul.f32 32.0, %v416
        %v418 = vsub.f32 1.0, %v417
        %v419 = vmul.f32 %v416, %v418
        %v420 = vadd.f32 %v416, %v419
        %vm421 = vweird.f32 %v416
        %v422 = vsel %vm421, %v416, %v420
        %v423 = vmul.f32 %v409, %v422
        %v424 = vmul.f32 %v412, %v422
        %v425 = vmul.f32 %v415, %v422
        %v426 = vsub.f32 %v402, %v423
        %v427 = vsub.f32 %v403, %v424
        %v428 = vsub.f32 %v404, %v425
        %v429 = vmul.f32 %v426, %v426
        %v430 = vmul.f32 %v427, %v427
        %v431 = vmul.f32 %v428, %v428
        %v432 = vsel %vm197, %v429, 0.0
        %433 = vadd.xlane.f32.xlu0 %v432
        %v434 = vpop.xlane.xlu0 %433
        %v435 = vsel %vm197, %v430, 0.0
        %436 = vadd.xlane.f32.xlu0 %v435
        %v437 = vpop.xlane.xlu0 %436
        %v438 = vsel %vm197, %v431, 0.0
        %439 = vadd.xlane.f32.xlu0 %v438
        %v440 = vpop.xlane.xlu0 %439
        %v441 = vmul.f32 %v434, %v422
        %v442 = vmul.f32 %v437, %v422
        %v443 = vmul.f32 %v440, %v422
        %v444 = vadd.f32 %v441, 1e-05
        %v445 = vadd.f32 %v442, 1e-05
        %v446 = vadd.f32 %v443, 1e-05
        %v447 = vrsqrt.pop %v444
        %v448 = vmul.f32 %v447, %v444
        %v449 = vmul.f32 %v448, %v447
        %v450 = vmul.f32 0.5, %v449
        %v451 = vsub.f32 1.5, %v450
        %v452 = vmul.f32 %v447, %v451
        %vm453 = vweird.f32 %v444
        %vm454 = vweird.f32 %v447
        %vm455 = vmor %vm453, %vm454
        %v456 = vsel %vm455, %v447, %v452
        %v457 = vrsqrt.pop %v445
        %v458 = vmul.f32 %v457, %v445
        %v459 = vmul.f32 %v458, %v457
        %v460 = vmul.f32 0.5, %v459
        %v461 = vsub.f32 1.5, %v460
        %v462 = vmul.f32 %v457, %v461
        %vm463 = vweird.f32 %v445
        %vm464 = vweird.f32 %v457
        %vm465 = vmor %vm463, %vm464
        %v466 = vsel %vm465, %v457, %v462
        %v467 = vrsqrt.pop %v446
        %v468 = vmul.f32 %v467, %v446
        %v469 = vmul.f32 %v468, %v467
        %v470 = vmul.f32 0.5, %v469
        %v471 = vsub.f32 1.5, %v470
        %v472 = vmul.f32 %v467, %v471
        %vm473 = vweird.f32 %v446
        %vm474 = vweird.f32 %v467
        %vm475 = vmor %vm473, %vm474
        %v476 = vsel %vm475, %v467, %v472
        %v477 = vmul.f32 %v426, %v456
        %v478 = vmul.f32 %v427, %v466
        %v479 = vmul.f32 %v428, %v476
        %v480 = vperm.slane %v405, 0
        %v481 = vmul.f32 %v477, %v480
        %v482 = vmul.f32 %v478, %v480
        %v483 = vmul.f32 %v479, %v480
        %v484 = vperm.slane %v406, 0
        %v485 = vadd.f32 %v481, %v484
        %v486 = vadd.f32 %v482, %v484
        %v487 = vadd.f32 %v483, %v484
        %v488 = vld [vmem:[#allocation2 + $0x10] sm:$0xff]
        %v489 = vld [vmem:[#allocation2 + $0x30] sm:$0xff]
        %v490 = vld [vmem:[#allocation2 + $0x50] sm:$0xff]
        %v491 = vld [vmem:[#allocation2 + $0x70] sm:$0xff]
        %v492 = vld [vmem:[%s2 + $0x2] sm:$0x1]
        %v493 = vperm.slane %v492, 0
        %v495 = vsel %vm197, %v485, 0
        %v498 = vsel %vm197, %v486, 0
        %v501 = vsel %vm197, %v487, 0
        %503 = vmatpush.msra.mxu0 0.0
        %504 = vmatpush.msra.mxu0 0.0
        %505 = vmatpush.msra.mxu0 0.0
        %506 = vmatpush.msra.mxu0 0.0
        %507 = vmatpush.msra.mxu0 0.0
        %508 = vmatpush.msra.mxu0 0.0
        %509 = vmatpush.msra.mxu0 0.0
        %510 = vmatpush.msra.mxu0 0.0
        %511 = vmatpush.msra.mxu0 0.0
        %512 = vmatpush.msra.mxu0 0.0
        %513 = vmatpush.msra.mxu0 0.0
        %514 = vmatpush.msra.mxu0 0.0
        %515 = vmatpush.msra.mxu0 %v491
        %516 = vmatpush.msra.mxu0 %v490
        %517 = vmatpush.msra.mxu0 %v489
        %518 = vmatpush.msra.mxu0 %v488
        %519 = vmatmul.f32.gmra.mxu0 %v495
        %v520 = vpop.f32.mrf.mxu0
        %v521 = vadd.f32 %v493, %v520
        %522 = vmatmul.f32.gmra.mxu0 %v498
        %v523 = vpop.f32.mrf.mxu0
        %v524 = vadd.f32 %v493, %v523
        %525 = vmatmul.f32.gmra.mxu0 %v501
        %v526 = vpop.f32.mrf.mxu0
        %v527 = vadd.f32 %v493, %v526
        %528 = vdwg.mxu0
        %v529 = vmax.f32 %v521, 0.0
        %v530 = vmax.f32 %v524, 0.0
        %v531 = vmax.f32 %v527, 0.0
        %v532 = vld [vmem:[#allocation2 + $0x80] sm:$0xff]
        %v533 = vld [vmem:[#allocation2 + $0xa0] sm:$0xff]
        %v534 = vld [vmem:[#allocation2 + $0xc0] sm:$0xff]
        %v535 = vld [vmem:[#allocation2 + $0xe0] sm:$0xff]
        %v536 = vld [vmem:[#allocation2 + $0x100] sm:$0xff]
        %v537 = vld [vmem:[#allocation2 + $0x120] sm:$0xff]
        %v538 = vld [vmem:[#allocation2 + $0x140] sm:$0xff]
        %v539 = vld [vmem:[#allocation2 + $0x160] sm:$0xff]
        %v540 = vld [vmem:[%s2 + $0x3] sm:$0x1]
        %v541 = vperm.slane %v540, 0
        %vm542 = vcmask 523264
        %v544 = vsel %vm542, %v529, 0
        %v547 = vsel %vm542, %v530, 0
        %v550 = vsel %vm542, %v531, 0
        %552 = vmatpush.msra.mxu0 0.0
        %553 = vmatpush.msra.mxu0 0.0
        %554 = vmatpush.msra.mxu0 0.0
        %555 = vmatpush.msra.mxu0 0.0
        %556 = vmatpush.msra.mxu0 0.0
        %557 = vmatpush.msra.mxu0 0.0
        %558 = vmatpush.msra.mxu0 0.0
        %559 = vmatpush.msra.mxu0 0.0
        %560 = vmatpush.msra.mxu0 %v539
        %561 = vmatpush.msra.mxu0 %v538
        %562 = vmatpush.msra.mxu0 %v537
        %563 = vmatpush.msra.mxu0 %v536
        %564 = vmatpush.msra.mxu0 %v535
        %565 = vmatpush.msra.mxu0 %v534
        %566 = vmatpush.msra.mxu0 %v533
        %567 = vmatpush.msra.mxu0 %v532
        %568 = vmatmul.f32.gmra.mxu0 %v544
        %v569 = vpop.f32.mrf.mxu0
        %v570 = vadd.f32 %v541, %v569
        %571 = vmatmul.f32.gmra.mxu0 %v547
        %v572 = vpop.f32.mrf.mxu0
        %v573 = vadd.f32 %v541, %v572
        %574 = vmatmul.f32.gmra.mxu0 %v550
        %v575 = vpop.f32.mrf.mxu0
        %v576 = vadd.f32 %v541, %v575
        %577 = vdwg.mxu0
        %v578 = vadd.f32 %v485, %v570
        %v579 = vadd.f32 %v486, %v573
        %v580 = vadd.f32 %v487, %v576
        %v581 = vld [vmem:[%s2 + $0x6] sm:$0x1]
        %v582 = vld [vmem:[%s2 + $0x7] sm:$0x1]
        %v583 = vsel %vm197, %v578, 0.0
        %584 = vadd.xlane.f32.xlu0 %v583
        %v585 = vpop.xlane.xlu0 %584
        %v586 = vsel %vm197, %v579, 0.0
        %587 = vadd.xlane.f32.xlu0 %v586
        %v588 = vpop.xlane.xlu0 %587
        %v589 = vsel %vm197, %v580, 0.0
        %590 = vadd.xlane.f32.xlu0 %v589
        %v591 = vpop.xlane.xlu0 %590
        %v592 = vmul.f32 %v585, %v422
        %v593 = vmul.f32 %v588, %v422
        %v594 = vmul.f32 %v591, %v422
        %v595 = vsub.f32 %v578, %v592
        %v596 = vsub.f32 %v579, %v593
        %v597 = vsub.f32 %v580, %v594
        %v598 = vmul.f32 %v595, %v595
        %v599 = vmul.f32 %v596, %v596
        %v600 = vmul.f32 %v597, %v597
        %v601 = vsel %vm197, %v598, 0.0
        %602 = vadd.xlane.f32.xlu0 %v601
        %v603 = vpop.xlane.xlu0 %602
        %v604 = vsel %vm197, %v599, 0.0
        %605 = vadd.xlane.f32.xlu0 %v604
        %v606 = vpop.xlane.xlu0 %605
        %v607 = vsel %vm197, %v600, 0.0
        %608 = vadd.xlane.f32.xlu0 %v607
        %v609 = vpop.xlane.xlu0 %608
        %v610 = vmul.f32 %v603, %v422
        %v611 = vmul.f32 %v606, %v422
        %v612 = vmul.f32 %v609, %v422
        %v613 = vadd.f32 %v610, 1e-05
        %v614 = vadd.f32 %v611, 1e-05
        %v615 = vadd.f32 %v612, 1e-05
        %v616 = vrsqrt.pop %v613
        %v617 = vmul.f32 %v616, %v613
        %v618 = vmul.f32 %v617, %v616
        %v619 = vmul.f32 0.5, %v618
        %v620 = vsub.f32 1.5, %v619
        %v621 = vmul.f32 %v616, %v620
        %vm622 = vweird.f32 %v613
        %vm623 = vweird.f32 %v616
        %vm624 = vmor %vm622, %vm623
        %v625 = vsel %vm624, %v616, %v621
        %v626 = vrsqrt.pop %v614
        %v627 = vmul.f32 %v626, %v614
        %v628 = vmul.f32 %v627, %v626
        %v629 = vmul.f32 0.5, %v628
        %v630 = vsub.f32 1.5, %v629
        %v631 = vmul.f32 %v626, %v630
        %vm632 = vweird.f32 %v614
        %vm633 = vweird.f32 %v626
        %vm634 = vmor %vm632, %vm633
        %v635 = vsel %vm634, %v626, %v631
        %v636 = vrsqrt.pop %v615
        %v637 = vmul.f32 %v636, %v615
        %v638 = vmul.f32 %v637, %v636
        %v639 = vmul.f32 0.5, %v638
        %v640 = vsub.f32 1.5, %v639
        %v641 = vmul.f32 %v636, %v640
        %vm642 = vweird.f32 %v615
        %vm643 = vweird.f32 %v636
        %vm644 = vmor %vm642, %vm643
        %v645 = vsel %vm644, %v636, %v641
        %v646 = vmul.f32 %v595, %v625
        %v647 = vmul.f32 %v596, %v635
        %v648 = vmul.f32 %v597, %v645
        %v649 = vperm.slane %v581, 0
        %v650 = vmul.f32 %v646, %v649
        %v651 = vmul.f32 %v647, %v649
        %v652 = vmul.f32 %v648, %v649
        %v653 = vperm.slane %v582, 0
        %v654 = vadd.f32 %v650, %v653
        %v655 = vadd.f32 %v651, %v653
        %v656 = vadd.f32 %v652, %v653
        %v657 = vld [vmem:[#allocation2 + $0x1e0] sm:$0xff]
        %v659 = vsel %vm283, %v657, 0
        %661 = vmatpush.msra.mxu0 0.0
        %662 = vmatpush.msra.mxu0 0.0
        %663 = vmatpush.msra.mxu0 0.0
        %664 = vmatpush.msra.mxu0 0.0
        %665 = vmatpush.msra.mxu0 0.0
        %666 = vmatpush.msra.mxu0 0.0
        %667 = vmatpush.msra.mxu0 0.0
        %668 = vmatpush.msra.mxu0 0.0
        %669 = vmatpush.msra.mxu0 0.0
        %670 = vmatpush.msra.mxu0 0.0
        %671 = vmatpush.msra.mxu0 0.0
        %672 = vmatpush.msra.mxu0 0.0
        %673 = vmatpush.msra.mxu0 0.0
        %674 = vmatpush.msra.mxu0 %v656
        %675 = vmatpush.msra.mxu0 %v655
        %676 = vmatpush.msra.mxu0 %v654
        %677 = vmatmul.f32.gmra.mxu0 %v659
        %v678 = vpop.f32.mrf.mxu0
        %v679 = vadd.f32 0.0, %v678
        %680 = vdwg.mxu0
        %v681 = vld [vmem:[#allocation2 + $0x18] sm:$0xff]
        %v682 = vld [vmem:[#allocation2 + $0x38] sm:$0xff]
        %v683 = vld [vmem:[#allocation2 + $0x58] sm:$0xff]
        %v684 = vld [vmem:[#allocation2 + $0x78] sm:$0xff]
        %v685 = vld [vmem:[%s2 + $0x8] sm:$0x1]
        %v686 = vperm.slane %v685, 0
        %v688 = vsel %vm197, %v679, 0
        %690 = vmatpush.msra.mxu0 0.0
        %691 = vmatpush.msra.mxu0 0.0
        %692 = vmatpush.msra.mxu0 0.0
        %693 = vmatpush.msra.mxu0 0.0
        %694 = vmatpush.msra.mxu0 0.0
        %695 = vmatpush.msra.mxu0 0.0
        %696 = vmatpush.msra.mxu0 0.0
        %697 = vmatpush.msra.mxu0 0.0
        %698 = vmatpush.msra.mxu0 0.0
        %699 = vmatpush.msra.mxu0 0.0
        %700 = vmatpush.msra.mxu0 0.0
        %701 = vmatpush.msra.mxu0 0.0
        %702 = vmatpush.msra.mxu0 %v684
        %703 = vmatpush.msra.mxu0 %v683
        %704 = vmatpush.msra.mxu0 %v682
        %705 = vmatpush.msra.mxu0 %v681
        %706 = vmatmul.f32.gmra.mxu0 %v688
        %v707 = vpop.f32.mrf.mxu0
        %v708 = vadd.f32 %v686, %v707
        %709 = vdwg.mxu0
        %v710 = vsub.f32 0.0, %v708
        %v711 = vmul.f32 %v710, 1.442695
        %v712 = vpow.pop %v711
        %v713 = vadd.f32 %v712, 1.0
        %v714 = vrcp.pop %v713
        %v715 = vmul.f32 %v713, %v714
        %v716 = vsub.f32 1.0, %v715
        %v717 = vmul.f32 %v714, %v716
        %v718 = vadd.f32 %v714, %v717
        %vm719 = vweird.f32 %v713
        %vm720 = vweird.f32 %v714
        %vm721 = vmor %vm719, %vm720
        %v722 = vsel %vm721, %v714, %v718
        %v723 = vand.u32 2147483647, %v713
        %vm724 = vcmp.eq.f32.partialorder %v723, 8.507059e+37
        %v725 = vand.u32 %v713, 2147483648
        %v726 = vor.u32 1.1754944e-38, %v725
        %v727 = vsel %vm724, %v726, %v722
        %v728 = vmul.f32 1.0, %v727
        %729 = vst [vmem:[%s181] sm:$0xff] %v728
        %s730 = sand.u32 %s94, 1
        %s731 = scalar_lea.sflag [#allocation4], %s730
        %s732 = sand.u32 %s94, 1
        %s733 = smul.addr %s732, 8
        %s734 = scalar_lea.vmem [#allocation5], %s733
        // Predicated region
        $region37: #{tpu_custom_call.1} parent=31 // pred_check
          %p735 = pneg %p104
        $region38: #{tpu_custom_call.1} parent=31 // pred_check_branch
          %737 = sbr.rel (%p735) target = $region40
        $region39: #{tpu_custom_call.1} parent=31 // pred_region
          %739 = vsyncadd %s731, 0
          %s740 = smul.addr %s18, 8
          %s741 = scalar_lea.hbm %s3, %s740
          %s743 = sshll.u32 %s734, 4
          %s744 = int_to_ptr.vmem [resolvable:$true] %s743
          %s745 = sshll.u32 %s741, 4
          %s746 = int_to_ptr.hbm [resolvable:$true] %s745
          %748 = dma.vmem_to_hbm [thread:$0]  %s744, 128, %s746, %s731
        $region40: #{tpu_custom_call.1} parent=31 // pred_fallthru
          _
      $region32: #{tpu_custom_call.1} parent=5 // pred_fallthru
        _
      %p749 = scmp.le.s32.totalorder 2, %s13
      // Predicated region
      $region41: #{tpu_custom_call.1} parent=5 // pred_check
        %p750 = pneg %p749
      $region42: #{tpu_custom_call.1} parent=5 // pred_check_branch
        %752 = sbr.rel (%p750) target = $region44
      $region43: #{tpu_custom_call.1} parent=5 // pred_region
        %s753 = ssub.s32 %s13, 2
        // Predicated region
        $region45: #{tpu_custom_call.1} parent=43 // pred_check
          %p754 = pneg %p110
        $region46: #{tpu_custom_call.1} parent=43 // pred_check_branch
          %756 = sbr.rel (%p754) target = $region48
        $region47: #{tpu_custom_call.1} parent=43 // pred_region
          %s757 = sand.u32 %s95, 1
          %s758 = scalar_lea.sflag [#allocation4], %s757
          %s759 = sand.u32 %s95, 1
          %s760 = smul.addr %s759, 8
          %s761 = scalar_lea.vmem [#allocation5], %s760
          %763 = dma.done %s758, 128
        $region48: #{tpu_custom_call.1} parent=43 // pred_fallthru
          _
      $region44: #{tpu_custom_call.1} parent=5 // pred_fallthru
        _
    $region6: #{tpu_custom_call.1} parent=1 // loop_footer
      %s17 = sadd.s32 1, %s13
    $region7: #{tpu_custom_call.1} parent=1 // loop_footer_branch
      %12 = sbr.rel target = $region3
    $region8: #{tpu_custom_call.1} parent=1 // loop_exit
      _
    %764 = vsyncpa [#allocation3], 1
    %s765 = scalar_lea.sflag [#allocation3], 1
    %766 = vsyncpa %s765, 1
    %767 = vsyncpa [#allocation4], 1
    %s768 = scalar_lea.sflag [#allocation4], 1
    %769 = vsyncpa %s768, 1

</llo_original>
